<compile_context>
chip_gen: v6e
topology: v6e:2x2x1
jax: 0.10.0
libtpu: 0.0.40
codegen_flags: <defaults>
</compile_context>

<pallas_src>
import functools
import math

import jax
import jax.numpy as jnp
from jax import lax
from jax.experimental import pallas as pl
from jax.experimental.pallas import tpu as pltpu


def _round_up(x, m):
    return ((x + m - 1) // m) * m


def _aals_kernel(logits_ref, targets_ref, ca_ref, out_ref, *,
                 n_total, n_classes, tile_n, tiles_per_core):
    p = pl.program_id(0)          # core-split axis ("parallel")
    i = pl.program_id(1)          # streaming / reduction axis ("arbitrary")

    # Output block index depends only on p -> it stays resident across i and
    # acts as the accumulator (canonical Pallas accumulate-into-out pattern).
    @pl.when(i == 0)
    def _():
        out_ref[...] = jnp.zeros_like(out_ref)

    x = logits_ref[...]                                   # (T, C) native dtype
    t, c = x.shape
    tgt = targets_ref[...]                                # (T, 1) int32
    ca = ca_ref[...].astype(jnp.float32)                  # (T, 1)

    # --- stable log-sum-exp over the class (lane) axis ----------------------
    # max / subtract / exp in the native dtype (bf16 VPU, 2x bf16 EUP rate on
    # v6e/v7x; compiler upcasts on v5e); the sum accumulates in f32.
    m = jnp.max(x, axis=-1, keepdims=True)                # (T, 1)
    shifted = x - m                                       # (T, C) native
    sumexp = jnp.sum(jnp.exp(shifted).astype(jnp.float32),
                     axis=-1, keepdims=True)              # (T, 1) f32
    lse = jnp.log(sumexp)                                 # (T, 1)

    # --- fused CE + uniform-KL, no dense (T, C) weight tensor ---------------
    #   per_row = lse - [ca*shifted[tgt] + (1-ca)/C * sum_c shifted]
    #             + (1-ca) * log(1/C)
    shifted_f32 = shifted.astype(jnp.float32)
    col = lax.broadcasted_iota(jnp.int32, (t, c), 1)
    tgt_shifted = jnp.sum(jnp.where(col == tgt, shifted_f32, 0.0),
                          axis=-1, keepdims=True)         # (T, 1)
    sum_shifted = jnp.sum(shifted_f32, axis=-1, keepdims=True)  # (T, 1)

    u = jnp.float32(1.0 / n_classes)
    log_u = jnp.float32(math.log(1.0 / n_classes))
    per_row = (lse
               - (ca * tgt_shifted + (1.0 - ca) * u * sum_shifted)
               + (1.0 - ca) * log_u)                      # (T, 1)

    # --- ragged N: select (not multiply) so garbage rows can't inject NaN ---
    row = (lax.broadcasted_iota(jnp.int32, (t, 1), 0)
           + (p * tiles_per_core + i) * tile_n)
    per_row = jnp.where(row < n_total, per_row, jnp.float32(0.0))

    out_ref[...] += jnp.sum(per_row, keepdims=True)       # (1,1) bcast (8,128)


def aals_loss(logits, targets, ca, *, tile_n=None, num_cores=2):
    """Pallas implementation of AALS.forward.

    Args:
      logits:    (N, C) float (any float dtype; streamed in its native dtype)
      targets:   (N,)   integer class indices
      ca:        (N,)   agreement weights
      tile_n:    optional batch tile size override (rounded to the dtype's
                 minimum sublane multiple)
      num_cores: parallel split of the batch (2 uses both TCs on v7x; extra
                 splits are harmless on single-TC chips)
    Returns:
      scalar float32 loss
    """
    n, c = logits.shape
    itemsize = jnp.dtype(logits.dtype).itemsize
    sublane = max(8, 32 // itemsize)        # 8 f32 / 16 bf16 / 32 int8-fp8

    if tile_n is None:
        target_bytes = 2 * 1024 * 1024      # ~2 MiB logits per block
        tile_n = max(sublane, target_bytes // max(1, c * itemsize))
    tile_n = max(sublane, (int(tile_n) // sublane) * sublane)
    tile_n = min(tile_n, _round_up(n, sublane))

    if tile_n * c * itemsize > 8 * 1024 * 1024:
        # TODO(synk): tile C with an online logsumexp for vocab-scale class
        # counts; untiled C would blow VMEM (v7x's 64 MiB physical first).
        raise NotImplementedError("class dimension too large for untiled-C kernel")

    num_tiles = (n + tile_n - 1) // tile_n
    num_par = num_cores if num_tiles >= num_cores else 1
    tiles_per_core = (num_tiles + num_par - 1) // num_par

    targets_2d = targets.astype(jnp.int32).reshape(n, 1)
    ca_2d = ca.astype(jnp.float32).reshape(n, 1)

    kernel = functools.partial(_aals_kernel, n_total=n, n_classes=c,
                               tile_n=tile_n, tiles_per_core=tiles_per_core)

    def tile_idx(p, i):
        # Clamp trailing (fully out-of-range) blocks of an odd split onto the
        # last real block; the kernel's row mask zeroes their contribution and
        # the repeated block index avoids a redundant DMA.
        return (jnp.minimum(p * tiles_per_core + i, num_tiles - 1), 0)

    out = pl.pallas_call(
        kernel,
        out_shape=jax.ShapeDtypeStruct((num_par * 8, 128), jnp.float32),
        grid_spec=pltpu.PrefetchScalarGridSpec(
            num_scalar_prefetch=0,
            grid=(num_par, tiles_per_core),
            in_specs=[
                pl.BlockSpec((tile_n, c), tile_idx),
                pl.BlockSpec((tile_n, 1), tile_idx),
                pl.BlockSpec((tile_n, 1), tile_idx),
            ],
            out_specs=pl.BlockSpec((8, 128), lambda p, i: (p, 0)),
        ),
        compiler_params=pltpu.CompilerParams(
            dimension_semantics=("parallel", "arbitrary"),
            vmem_limit_bytes=48 * 1024 * 1024,
        ),
    )(logits, targets_2d, ca_2d)

    partials = out.reshape(num_par, 8, 128)[:, 0, 0]       # one value per core
    return partials.sum() * jnp.float32(1.0 / n)


def aals_loss_ref(logits, targets, ca):
    """Pure-JAX reference mirroring the PyTorch module."""
    logits = logits.astype(jnp.float32)
    log_preds = jax.nn.log_softmax(logits, axis=1)
    n, c = logits.shape
    onehot = jax.nn.one_hot(targets, c, dtype=log_preds.dtype)
    uni = 1.0 / c
    loss_ce = -(onehot * log_preds).sum(axis=1)
    loss_kld = (uni * (jnp.log(uni) - log_preds)).sum(axis=1)
    return (ca * loss_ce + (1.0 - ca) * loss_kld).mean()


if __name__ == "__main__":
    key = jax.random.PRNGKey(0)
    k1, k2, k3 = jax.random.split(key, 3)

    N, C = 20, 32
    logits = jax.random.normal(k1, (N, C), dtype=jnp.float32)
    targets = jax.random.randint(k2, (N,), 0, C, dtype=jnp.int32)
    ca = jax.random.uniform(k3, (N,), dtype=jnp.float32)

    # (1) f32, small explicit tile: ragged tail, 2-D grid (2,2) with one
    #     clamped duplicate block -> exercises masking + core-split partials.
    loss = aals_loss(logits, targets, ca, tile_n=8)
    jax.block_until_ready(loss)
    ref = aals_loss_ref(logits, targets, ca)
    assert jnp.allclose(loss, ref, atol=1e-5, rtol=1e-5), (loss, ref)

    # (2) bf16, auto-tiled single partial block, native-dtype streaming/compute.
    logits_bf16 = logits.astype(jnp.bfloat16)
    loss_b = aals_loss(logits_bf16, targets, ca)
    jax.block_until_ready(loss_b)
    ref_b = aals_loss_ref(logits_bf16, targets, ca)
    assert jnp.allclose(loss_b, ref_b, atol=2e-2, rtol=2e-2), (loss_b, ref_b)

    # (3) bf16, two tiles -> one tile per "core" partial, ragged last block.
    loss_b2 = aals_loss(logits_bf16, targets, ca, tile_n=16)
    jax.block_until_ready(loss_b2)
    assert jnp.allclose(loss_b2, ref_b, atol=2e-2, rtol=2e-2), (loss_b2, ref_b)

    print("KERNEL_OK")
</pallas_src>

<mosaic_0001>
module attributes {stable_mosaic.version = 11 : i64} {
  func.func @_aals_kernel(%arg0: i32, %arg1: i32, %arg2: memref<8x32xf32, #tpu.memory_space<vmem>>, %arg3: memref<8x1xi32, #tpu.memory_space<vmem>>, %arg4: memref<8x1xf32, #tpu.memory_space<vmem>>, %arg5: memref<8x128xf32, #tpu.memory_space<vmem>>) attributes {dimension_semantics = [#tpu.dimension_semantics<parallel>, #tpu.dimension_semantics<arbitrary>], iteration_bounds = array<i64: 2, 2>, scalar_prefetch = 0 : i64, scratch_operands = 0 : i64, tpu.core_type = #tpu.core_type<tc>, window_params = [{transform_indices = @transform_0, window_bounds = array<i64: 8, 32>}, {transform_indices = @transform_1, window_bounds = array<i64: 8, 1>}, {transform_indices = @transform_2, window_bounds = array<i64: 8, 1>}, {transform_indices = @transform_3, window_bounds = array<i64: 8, 128>}]} {
    %c0_i32 = arith.constant 0 : i32
    %0 = arith.cmpi eq, %arg1, %c0_i32 : i32
    %1 = arith.extui %0 : i1 to i32
    %c0_i32_0 = arith.constant 0 : i32
    %2 = arith.cmpi ne, %1, %c0_i32_0 : i32
    scf.if %2 {
      %cst_20 = arith.constant 0.000000e+00 : f32
      %55 = vector.broadcast %cst_20 : f32 to vector<8x128xf32>
      %c0_21 = arith.constant 0 : index
      %c0_22 = arith.constant 0 : index
      %56 = vector.load %arg5[%c0_21, %c0_22] : memref<8x128xf32, #tpu.memory_space<vmem>>, vector<8x128xf32>
      tpu.vector_store %arg5[%c0_21, %c0_22], %55 {strides = array<i32>} : memref<8x128xf32, #tpu.memory_space<vmem>>, vector<8x128xf32>,
    } else {
    }
    %c0 = arith.constant 0 : index
    %c0_1 = arith.constant 0 : index
    %3 = vector.load %arg2[%c0, %c0_1] : memref<8x32xf32, #tpu.memory_space<vmem>>, vector<8x32xf32>
    %c0_2 = arith.constant 0 : index
    %c0_3 = arith.constant 0 : index
    %4 = vector.load %arg3[%c0_2, %c0_3] : memref<8x1xi32, #tpu.memory_space<vmem>>, vector<8x1xi32>
    %c0_4 = arith.constant 0 : index
    %c0_5 = arith.constant 0 : index
    %5 = vector.load %arg4[%c0_4, %c0_5] : memref<8x1xf32, #tpu.memory_space<vmem>>, vector<8x1xf32>
    %cst = arith.constant dense<0xFF800000> : vector<8xf32>
    %6 = vector.multi_reduction <maximumf>, %3, %cst [1] : vector<8x32xf32> to vector<8xf32>
    %7 = vector.shape_cast %6 : vector<8xf32> to vector<8x1xf32>
    %8 = vector.broadcast %7 : vector<8x1xf32> to vector<8x32xf32>
    %9 = arith.subf %3, %8 : vector<8x32xf32>
    %10 = math.exp %9 : vector<8x32xf32>
    %cst_6 = arith.constant dense<0.000000e+00> : vector<8xf32>
    %11 = vector.multi_reduction <add>, %10, %cst_6 [1] : vector<8x32xf32> to vector<8xf32>
    %12 = vector.shape_cast %11 : vector<8xf32> to vector<8x1xf32>
    %13 = math.log %12 : vector<8x1xf32>
    %14 = tpu.iota {dimensions = array<i32: 1>} : vector<8x32xi32>
    %15 = vector.broadcast %4 : vector<8x1xi32> to vector<8x32xi32>
    %16 = arith.cmpi eq, %14, %15 : vector<8x32xi32>
    %cst_7 = arith.constant 0.000000e+00 : f32
    %17 = vector.broadcast %cst_7 : f32 to vector<8x32xf32>
    %18 = arith.select %16, %9, %17 : vector<8x32xi1>, vector<8x32xf32>
    %cst_8 = arith.constant dense<0.000000e+00> : vector<8xf32>
    %19 = vector.multi_reduction <add>, %18, %cst_8 [1] : vector<8x32xf32> to vector<8xf32>
    %20 = vector.shape_cast %19 : vector<8xf32> to vector<8x1xf32>
    %cst_9 = arith.constant dense<0.000000e+00> : vector<8xf32>
    %21 = vector.multi_reduction <add>, %9, %cst_9 [1] : vector<8x32xf32> to vector<8xf32>
    %22 = vector.shape_cast %21 : vector<8xf32> to vector<8x1xf32>
    %23 = arith.mulf %5, %20 : vector<8x1xf32>
    %cst_10 = arith.constant 1.000000e+00 : f32
    %24 = vector.broadcast %cst_10 : f32 to vector<8x1xf32>
    %25 = arith.subf %24, %5 : vector<8x1xf32>
    %cst_11 = arith.constant 3.125000e-02 : f32
    %26 = vector.broadcast %cst_11 : f32 to vector<8x1xf32>
    %27 = arith.mulf %25, %26 : vector<8x1xf32>
    %28 = arith.mulf %27, %22 : vector<8x1xf32>
    %29 = arith.addf %23, %28 : vector<8x1xf32>
    %30 = arith.subf %13, %29 : vector<8x1xf32>
    %cst_12 = arith.constant 1.000000e+00 : f32
    %31 = vector.broadcast %cst_12 : f32 to vector<8x1xf32>
    %32 = arith.subf %31, %5 : vector<8x1xf32>
    %cst_13 = arith.constant -3.46573591 : f32
    %33 = vector.broadcast %cst_13 : f32 to vector<8x1xf32>
    %34 = arith.mulf %32, %33 : vector<8x1xf32>
    %35 = arith.addf %30, %34 : vector<8x1xf32>
    %36 = tpu.iota {dimensions = array<i32: 0>} : vector<8x1xi32>
    %c2_i32 = arith.constant 2 : i32
    %37 = arith.muli %arg0, %c2_i32 : i32
    %38 = arith.addi %37, %arg1 : i32
    %c8_i32 = arith.constant 8 : i32
    %39 = arith.muli %38, %c8_i32 : i32
    %40 = vector.broadcast %39 : i32 to vector<8x1xi32>
    %41 = arith.addi %36, %40 : vector<8x1xi32>
    %c20_i32 = arith.constant 20 : i32
    %42 = vector.broadcast %c20_i32 : i32 to vector<8x1xi32>
    %43 = arith.cmpi slt, %41, %42 : vector<8x1xi32>
    %cst_14 = arith.constant 0.000000e+00 : f32
    %44 = vector.broadcast %cst_14 : f32 to vector<8x1xf32>
    %45 = arith.select %43, %35, %44 : vector<8x1xi1>, vector<8x1xf32>
    %c0_15 = arith.constant 0 : index
    %c0_16 = arith.constant 0 : index
    %46 = vector.load %arg5[%c0_15, %c0_16] : memref<8x128xf32, #tpu.memory_space<vmem>>, vector<8x128xf32>
    %47 = vector.shape_cast %45 : vector<8x1xf32> to vector<1x8x1xf32>
    %cst_17 = arith.constant dense<0.000000e+00> : vector<1xf32>
    %48 = vector.multi_reduction <add>, %47, %cst_17 [1, 2] : vector<1x8x1xf32> to vector<1xf32>
    %49 = vector.shape_cast %48 : vector<1xf32> to vector<1x1x1xf32>
    %50 = vector.extract %49[0, 0, 0] : f32 from vector<1x1x1xf32>
    %51 = vector.broadcast %50 : f32 to vector<1x1xf32>
    %52 = vector.broadcast %51 : vector<1x1xf32> to vector<8x128xf32>
    %53 = arith.addf %46, %52 : vector<8x128xf32>
    %c0_18 = arith.constant 0 : index
    %c0_19 = arith.constant 0 : index
    %54 = vector.load %arg5[%c0_18, %c0_19] : memref<8x128xf32, #tpu.memory_space<vmem>>, vector<8x128xf32>
    tpu.vector_store %arg5[%c0_18, %c0_19], %53 {strides = array<i32>} : memref<8x128xf32, #tpu.memory_space<vmem>>, vector<8x128xf32>,
    return
  }
  func.func @transform_0(%arg0: i32, %arg1: i32) -> (i32, i32) {
    %c2_i32 = arith.constant 2 : i32
    %0 = arith.muli %arg0, %c2_i32 : i32
    %1 = arith.addi %0, %arg1 : i32
    %c2_i32_0 = arith.constant 2 : i32
    %2 = arith.minsi %1, %c2_i32_0 : i32
    %c0_i32 = arith.constant 0 : i32
    %c0_i32_1 = arith.constant 0 : i32
    return %2, %c0_i32 : i32, i32
  }
  func.func @transform_1(%arg0: i32, %arg1: i32) -> (i32, i32) {
    %c2_i32 = arith.constant 2 : i32
    %0 = arith.muli %arg0, %c2_i32 : i32
    %1 = arith.addi %0, %arg1 : i32
    %c2_i32_0 = arith.constant 2 : i32
    %2 = arith.minsi %1, %c2_i32_0 : i32
    %c0_i32 = arith.constant 0 : i32
    %c0_i32_1 = arith.constant 0 : i32
    return %2, %c0_i32 : i32, i32
  }
  func.func @transform_2(%arg0: i32, %arg1: i32) -> (i32, i32) {
    %c2_i32 = arith.constant 2 : i32
    %0 = arith.muli %arg0, %c2_i32 : i32
    %1 = arith.addi %0, %arg1 : i32
    %c2_i32_0 = arith.constant 2 : i32
    %2 = arith.minsi %1, %c2_i32_0 : i32
    %c0_i32 = arith.constant 0 : i32
    %c0_i32_1 = arith.constant 0 : i32
    return %2, %c0_i32 : i32, i32
  }
  func.func @transform_3(%arg0: i32, %arg1: i32) -> (i32, i32) {
    %c0_i32 = arith.constant 0 : i32
    %c0_i32_0 = arith.constant 0 : i32
    return %arg0, %c0_i32 : i32, i32
  }
}

</mosaic_0001>

<llo_original>
// kernel: tpu_custom_call.1
$region0: #{tpu_custom_call.1}
  #allocation0 [shape = 'u32[]', space=smem, size = 0x4, offset = 0x4, fixed_abs, tag = 'smem constant byte address 0x4 - core index']
  #allocation1 [shape = 'u32[144,128]{1,0:T(1,128)}', space=vmem, size = 0x12000, scoped, tag = 'internal scratch']
  %s0 = inlined_call_operand.vmem [shape: f32[20,32], index: 0, kind: input, shape index: {}]
  %s1 = inlined_call_operand.vmem [shape: s32[20,1], index: 1, kind: input, shape index: {}]
  %s2 = inlined_call_operand.vmem [shape: f32[20,1], index: 2, kind: input, shape index: {}]
  %s3 = inlined_call_operand.hbm [shape: f32[16,128], index: 3, kind: output, shape index: {}]
  %s4 = sld [smem:[#allocation0]]
  $region49: #{tpu_custom_call.1} parent=0
    _
  %s6 = ssub.s32 1, %s4
  %s7 = scalar_select 0, %s6, %s4
  $region1: #{tpu_custom_call.1} parent=0
    #allocation2 [shape = 'u8[8192]{0}', space=vmem, size = 0x2000, scoped, tag = 'output window, operand 0']
    #allocation3 [shape = 's32[2]{0}', space=sflag, size = 0x8, scoped, tag = 'scoped memory for tpu_custom_call.1']
    %8 = vsyncpa [#allocation3], 0
    %s9 = scalar_lea.sflag [#allocation3], 1
    %10 = vsyncpa %s9, 0
    loop: start=0, step=1, limit=6
    $region2: #{tpu_custom_call.1} parent=1 // loop_pre_header
      _
    $region3: #{tpu_custom_call.1} parent=1 // loop_header
      %s12 = sphi 0, %s16
      %p13 = scmp.ge.s32.totalorder %s12, 6
      %s19 = sphi 0, %s31
      %s20 = sphi 0, %s27
      %s21 = sphi 0, %s19
      %s22 = sphi 0, %s20
      %s23 = sphi 0, %s21
      %s24 = sphi 0, %s22
      %s42 = sphi 0, %s44
      %s45 = sphi 0, %s42
      %s46 = sphi 0, %s45
      %s62 = sphi 0, %s46
      %s76 = sphi 0, %s78
      %s79 = sphi 0, %s76
      %s80 = sphi 0, %s79
      %s96 = sphi 0, %s80
      %s110 = sphi 0, %s112
      %s113 = sphi 0, %s110
      %s114 = sphi 0, %s113
      %s130 = sphi 0, %s114
      %s136 = sphi 0, %s138
      %s139 = sphi 0, %s136
      %s140 = sphi 0, %s139
      %s156 = sphi 0, %s140
    $region4: #{tpu_custom_call.1} parent=1 // loop_header_branch
      %15 = sbr.rel (%p13) target = $region8
    $region5: #{tpu_custom_call.1} parent=1 // loop_body
      %s17 = ssub.s32 %s12, 1
      %s18 = ssub.s32 %s12, 2
      %s25 = sadd.s32 1, %s20
      %p26 = scmp.ge.s32.totalorder %s25, 2
      %s27 = scalar_select %p26, 0, %s25
      %s28 = sadd.s32 1, %s19
      %s29 = scalar_select %p26, %s28, %s19
      %p30 = scmp.ge.s32.totalorder %s29, 2
      %s31 = scalar_select %p30, 0, %s29
      %s32 = smul.u32 %s19, 2
      %s33 = sadd.s32 %s32, %s20
      %p34 = scmp.lt.s32.totalorder %s33, 2
      %s35 = scalar_select %p34, %s33, 2
      %s36 = smul.u32 %s31, 2
      %s37 = sadd.s32 %s36, %s27
      %p38 = scmp.lt.s32.totalorder %s37, 2
      %s39 = scalar_select %p38, %s37, 2
      %s40 = ssub.s32 %s35, %s39
      %p41 = scmp.eq.s32.totalorder %s40, 0
      %s43 = sadd.s32 %s42, 1
      %s44 = scalar_select %p41, %s42, %s43
      %p47 = pneg %p41
      %p48 = scmp.eq.s32.totalorder %s12, 3
      %p49 = por %p47, %p48
      %p50 = scmp.ne.s32.totalorder %s42, %s45
      %p51 = scmp.eq.s32.totalorder %s12, 0
      %p52 = por %p50, %p51
      %p53 = scmp.ne.s32.totalorder %s42, %s45
      %p54 = scmp.eq.s32.totalorder %s17, 3
      %p55 = por %p53, %p54
      %p56 = scmp.ne.s32.totalorder %s45, %s46
      %p57 = scmp.eq.s32.totalorder %s17, 0
      %p58 = por %p56, %p57
      %p59 = scmp.ne.s32.totalorder %s45, %s46
      %p60 = scmp.eq.s32.totalorder %s18, 3
      %p61 = por %p59, %p60
      %p63 = scmp.ne.s32.totalorder %s46, %s62
      %p64 = scmp.eq.s32.totalorder %s18, 0
      %p65 = por %p63, %p64
      %s66 = smul.u32 %s19, 2
      %s67 = sadd.s32 %s66, %s20
      %p68 = scmp.lt.s32.totalorder %s67, 2
      %s69 = scalar_select %p68, %s67, 2
      %s70 = smul.u32 %s31, 2
      %s71 = sadd.s32 %s70, %s27
      %p72 = scmp.lt.s32.totalorder %s71, 2
      %s73 = scalar_select %p72, %s71, 2
      %s74 = ssub.s32 %s69, %s73
      %p75 = scmp.eq.s32.totalorder %s74, 0
      %s77 = sadd.s32 %s76, 1
      %s78 = scalar_select %p75, %s76, %s77
      %p81 = pneg %p75
      %p82 = scmp.eq.s32.totalorder %s12, 3
      %p83 = por %p81, %p82
      %p84 = scmp.ne.s32.totalorder %s76, %s79
      %p85 = scmp.eq.s32.totalorder %s12, 0
      %p86 = por %p84, %p85
      %p87 = scmp.ne.s32.totalorder %s76, %s79
      %p88 = scmp.eq.s32.totalorder %s17, 3
      %p89 = por %p87, %p88
      %p90 = scmp.ne.s32.totalorder %s79, %s80
      %p91 = scmp.eq.s32.totalorder %s17, 0
      %p92 = por %p90, %p91
      %p93 = scmp.ne.s32.totalorder %s79, %s80
      %p94 = scmp.eq.s32.totalorder %s18, 3
      %p95 = por %p93, %p94
      %p97 = scmp.ne.s32.totalorder %s80, %s96
      %p98 = scmp.eq.s32.totalorder %s18, 0
      %p99 = por %p97, %p98
      %s100 = smul.u32 %s19, 2
      %s101 = sadd.s32 %s100, %s20
      %p102 = scmp.lt.s32.totalorder %s101, 2
      %s103 = scalar_select %p102, %s101, 2
      %s104 = smul.u32 %s31, 2
      %s105 = sadd.s32 %s104, %s27
      %p106 = scmp.lt.s32.totalorder %s105, 2
      %s107 = scalar_select %p106, %s105, 2
      %s108 = ssub.s32 %s103, %s107
      %p109 = scmp.eq.s32.totalorder %s108, 0
      %s111 = sadd.s32 %s110, 1
      %s112 = scalar_select %p109, %s110, %s111
      %p115 = pneg %p109
      %p116 = scmp.eq.s32.totalorder %s12, 3
      %p117 = por %p115, %p116
      %p118 = scmp.ne.s32.totalorder %s110, %s113
      %p119 = scmp.eq.s32.totalorder %s12, 0
      %p120 = por %p118, %p119
      %p121 = scmp.ne.s32.totalorder %s110, %s113
      %p122 = scmp.eq.s32.totalorder %s17, 3
      %p123 = por %p121, %p122
      %p124 = scmp.ne.s32.totalorder %s113, %s114
      %p125 = scmp.eq.s32.totalorder %s17, 0
      %p126 = por %p124, %p125
      %p127 = scmp.ne.s32.totalorder %s113, %s114
      %p128 = scmp.eq.s32.totalorder %s18, 3
      %p129 = por %p127, %p128
      %p131 = scmp.ne.s32.totalorder %s114, %s130
      %p132 = scmp.eq.s32.totalorder %s18, 0
      %p133 = por %p131, %p132
      %s134 = ssub.s32 %s19, %s31
      %p135 = scmp.eq.s32.totalorder %s134, 0
      %s137 = sadd.s32 %s136, 1
      %s138 = scalar_select %p135, %s136, %s137
      %p141 = pneg %p135
      %p142 = scmp.eq.s32.totalorder %s12, 3
      %p143 = por %p141, %p142
      %p144 = scmp.ne.s32.totalorder %s136, %s139
      %p145 = scmp.eq.s32.totalorder %s12, 0
      %p146 = por %p144, %p145
      %p147 = scmp.ne.s32.totalorder %s136, %s139
      %p148 = scmp.eq.s32.totalorder %s17, 3
      %p149 = por %p147, %p148
      %p150 = scmp.ne.s32.totalorder %s139, %s140
      %p151 = scmp.eq.s32.totalorder %s17, 0
      %p152 = por %p150, %p151
      %p153 = scmp.ne.s32.totalorder %s139, %s140
      %p154 = scmp.eq.s32.totalorder %s18, 3
      %p155 = por %p153, %p154
      %p157 = scmp.ne.s32.totalorder %s140, %s156
      %p158 = scmp.eq.s32.totalorder %s18, 0
      %p159 = por %p157, %p158
      %p160 = scmp.le.s32.totalorder 1, %s12
      %p161 = scmp.lt.s32.totalorder %s12, 5
      %p162 = pnand %p160, %p161
      %p163 = pneg %p162
      // Predicated region
      $region9: #{tpu_custom_call.1} parent=5 // pred_check
        _
      $region10: #{tpu_custom_call.1} parent=5 // pred_check_branch
        %165 = sbr.rel (%p162) target = $region12
      $region11: #{tpu_custom_call.1} parent=5 // pred_region
        %s166 = ssub.s32 %s12, 1
      $region12: #{tpu_custom_call.1} parent=5 // pred_fallthru
        _
      %p167 = scmp.lt.s32.totalorder %s12, 4
      // Predicated region
      $region13: #{tpu_custom_call.1} parent=5 // pred_check
        %p168 = pneg %p167
      $region14: #{tpu_custom_call.1} parent=5 // pred_check_branch
        %170 = sbr.rel (%p168) target = $region16
      $region15: #{tpu_custom_call.1} parent=5 // pred_region
        // Predicated region
        $region17: #{tpu_custom_call.1} parent=15 // pred_check
          %p171 = pneg %p52
        $region18: #{tpu_custom_call.1} parent=15 // pred_check_branch
          %173 = sbr.rel (%p171) target = $region20
        $region19: #{tpu_custom_call.1} parent=15 // pred_region
          %s174 = smul.u32 %s19, 2
          %s175 = sadd.s32 %s174, %s20
          %p176 = scmp.lt.s32.totalorder %s175, 2
          %s177 = scalar_select %p176, %s175, 2
          %p178 = scmp.lt.s32.totalorder %s177, 2
          %s179 = scalar_select %p178, %s177, 2
          %s180 = smul.addr %s179, 8
          %s181 = scalar_lea.vmem %s0, %s180
          %s182 = smul.u32 %s19, 2
          %s183 = sadd.s32 %s182, %s20
          %p184 = scmp.lt.s32.totalorder %s183, 2
          %s185 = scalar_select %p184, %s183, 2
        $region20: #{tpu_custom_call.1} parent=15 // pred_fallthru
          _
        // Predicated region
        $region21: #{tpu_custom_call.1} parent=15 // pred_check
          %p186 = pneg %p86
        $region22: #{tpu_custom_call.1} parent=15 // pred_check_branch
          %188 = sbr.rel (%p186) target = $region24
        $region23: #{tpu_custom_call.1} parent=15 // pred_region
          %s189 = smul.u32 %s19, 2
          %s190 = sadd.s32 %s189, %s20
          %p191 = scmp.lt.s32.totalorder %s190, 2
          %s192 = scalar_select %p191, %s190, 2
          %p193 = scmp.lt.s32.totalorder %s192, 2
          %s194 = scalar_select %p193, %s192, 2
          %s195 = smul.addr %s194, 8
          %s196 = scalar_lea.vmem %s1, %s195
          %s197 = smul.u32 %s19, 2
          %s198 = sadd.s32 %s197, %s20
          %p199 = scmp.lt.s32.totalorder %s198, 2
          %s200 = scalar_select %p199, %s198, 2
        $region24: #{tpu_custom_call.1} parent=15 // pred_fallthru
          _
        // Predicated region
        $region25: #{tpu_custom_call.1} parent=15 // pred_check
          %p201 = pneg %p120
        $region26: #{tpu_custom_call.1} parent=15 // pred_check_branch
          %203 = sbr.rel (%p201) target = $region28
        $region27: #{tpu_custom_call.1} parent=15 // pred_region
          %s204 = smul.u32 %s19, 2
          %s205 = sadd.s32 %s204, %s20
          %p206 = scmp.lt.s32.totalorder %s205, 2
          %s207 = scalar_select %p206, %s205, 2
          %p208 = scmp.lt.s32.totalorder %s207, 2
          %s209 = scalar_select %p208, %s207, 2
          %s210 = smul.addr %s209, 8
          %s211 = scalar_lea.vmem %s2, %s210
          %s212 = smul.u32 %s19, 2
          %s213 = sadd.s32 %s212, %s20
          %p214 = scmp.lt.s32.totalorder %s213, 2
          %s215 = scalar_select %p214, %s213, 2
        $region28: #{tpu_custom_call.1} parent=15 // pred_fallthru
          _
      $region16: #{tpu_custom_call.1} parent=5 // pred_fallthru
        _
      %p216 = scmp.le.s32.totalorder 1, %s12
      %p217 = scmp.lt.s32.totalorder %s12, 5
      %p218 = pnand %p216, %p217
      %p219 = pneg %p218
      // Predicated region
      $region29: #{tpu_custom_call.1} parent=5 // pred_check
        _
      $region30: #{tpu_custom_call.1} parent=5 // pred_check_branch
        %221 = sbr.rel (%p218) target = $region32
      $region31: #{tpu_custom_call.1} parent=5 // pred_region
        %s222 = ssub.s32 %s12, 1
        %s223 = smul.u32 %s21, 2
        %s224 = sadd.s32 %s223, %s22
        %p225 = scmp.lt.s32.totalorder %s224, 2
        %s226 = scalar_select %p225, %s224, 2
        %p227 = scmp.lt.s32.totalorder %s226, 2
        %s228 = scalar_select %p227, %s226, 2
        %s229 = smul.addr %s228, 8
        %s230 = scalar_lea.vmem %s0, %s229
        %p231 = pneg %p58
        %p232 = pneg %p55
        %s233 = smul.u32 %s21, 2
        %s234 = sadd.s32 %s233, %s22
        %p235 = scmp.lt.s32.totalorder %s234, 2
        %s236 = scalar_select %p235, %s234, 2
        %p237 = scmp.lt.s32.totalorder %s236, 2
        %s238 = scalar_select %p237, %s236, 2
        %s239 = smul.addr %s238, 8
        %s240 = scalar_lea.vmem %s1, %s239
        %p241 = pneg %p92
        %p242 = pneg %p89
        %s243 = smul.u32 %s21, 2
        %s244 = sadd.s32 %s243, %s22
        %p245 = scmp.lt.s32.totalorder %s244, 2
        %s246 = scalar_select %p245, %s244, 2
        %p247 = scmp.lt.s32.totalorder %s246, 2
        %s248 = scalar_select %p247, %s246, 2
        %s249 = smul.addr %s248, 8
        %s250 = scalar_lea.vmem %s2, %s249
        %p251 = pneg %p126
        %p252 = pneg %p123
        %p253 = pneg %p152
        %p254 = pneg %p149
        %s255 = sand.u32 %s139, 1
        %s256 = scalar_lea.sflag [#allocation3], %s255
        %s257 = sand.u32 %s139, 1
        %s258 = smul.addr %s257, 8
        %s259 = scalar_lea.vmem [#allocation2], %s258
        %s260 = smul.u32 %s21, 2
        %s261 = sadd.s32 %s260, %s22
        %p262 = scmp.lt.s32.totalorder %s261, 2
        %s263 = scalar_select %p262, %s261, 2
        %p264 = scmp.lt.s32.totalorder %s263, 2
        %s265 = scalar_select %p264, %s263, 2
        %s266 = smul.addr %s265, 8
        %s267 = scalar_lea.vmem %s0, %s266
        %s268 = smul.u32 %s21, 2
        %s269 = sadd.s32 %s268, %s22
        %p270 = scmp.lt.s32.totalorder %s269, 2
        %s271 = scalar_select %p270, %s269, 2
        %s272 = smul.u32 %s21, 2
        %s273 = sadd.s32 %s272, %s22
        %p274 = scmp.lt.s32.totalorder %s273, 2
        %s275 = scalar_select %p274, %s273, 2
        %p276 = scmp.lt.s32.totalorder %s275, 2
        %s277 = scalar_select %p276, %s275, 2
        %s278 = smul.addr %s277, 8
        %s279 = scalar_lea.vmem %s1, %s278
        %s280 = smul.u32 %s21, 2
        %s281 = sadd.s32 %s280, %s22
        %p282 = scmp.lt.s32.totalorder %s281, 2
        %s283 = scalar_select %p282, %s281, 2
        %s284 = smul.u32 %s21, 2
        %s285 = sadd.s32 %s284, %s22
        %p286 = scmp.lt.s32.totalorder %s285, 2
        %s287 = scalar_select %p286, %s285, 2
        %p288 = scmp.lt.s32.totalorder %s287, 2
        %s289 = scalar_select %p288, %s287, 2
        %s290 = smul.addr %s289, 8
        %s291 = scalar_lea.vmem %s2, %s290
        %s292 = smul.u32 %s21, 2
        %s293 = sadd.s32 %s292, %s22
        %p294 = scmp.lt.s32.totalorder %s293, 2
        %s295 = scalar_select %p294, %s293, 2
        %p296 = scmp.eq.s32.totalorder %s22, 0
        // Predicated region
        $region33: #{tpu_custom_call.1} parent=31 // pred_check
          %p297 = pneg %p296
        $region34: #{tpu_custom_call.1} parent=31 // pred_check_branch
          %299 = sbr.rel (%p297) target = $region36
        $region35: #{tpu_custom_call.1} parent=31 // pred_region
          %300 = vst [vmem:[%s259] sm:$0xff] 0.0
        $region36: #{tpu_custom_call.1} parent=31 // pred_fallthru
          _
        %v301 = vld [vmem:[%s267] sm:$0xff]
        %v302 = vld [vmem:[%s279] sm:$0xff]
        %v303 = vld [vmem:[%s291] sm:$0xff]
        %vm304 = vcmask 261120
        %v305 = vsel %vm304, %v301, -inf
        %306 = vmax.xlane.f32.xlu0 %v305
        %v307 = vpop.xlane.xlu0 %306
        %v308 = vsub.f32 %v301, %v307
        %v309 = vmul.f32 %v308, 1.442695
        %v310 = vpow.pop %v309
        %v311 = vsel %vm304, %v310, 0.0
        %312 = vadd.xlane.f32.xlu0 %v311
        %v313 = vpop.xlane.xlu0 %312
        %v314 = vlog2.pop %v313
        %v315 = vmul.f32 %v314, 0.6931472
        %v316 = vlaneseq
        %v317 = vand.u32 %v316, 127
        %318 = vset.pattern.permute.xlu0 0
        %319 = vperm.xlu0 %318, %v302
        %v320 = vpop.permute.xlu0 %319
        %vm321 = vcmp.eq.s32.totalorder %v317, %v320
        %v322 = vsel %vm321, %v308, 0.0
        %v323 = vsel %vm304, %v322, 0.0
        %324 = vadd.xlane.f32.xlu0 %v323
        %v325 = vpop.xlane.xlu0 %324
        %v326 = vsel %vm304, %v308, 0.0
        %327 = vadd.xlane.f32.xlu0 %v326
        %v328 = vpop.xlane.xlu0 %327
        %v329 = vmul.f32 %v303, %v325
        %v330 = vsub.f32 1.0, %v303
        %v331 = vmul.f32 %v330, 0.03125
        %v332 = vmul.f32 %v331, %v328
        %v333 = vadd.f32 %v329, %v332
        %v334 = vsub.f32 %v315, %v333
        %v335 = vmul.f32 %v330, -3.465736
        %v336 = vadd.f32 %v334, %v335
        %v337 = vlaneseq
        %v338 = vshrl.u32 %v337, 7
        %s339 = smul.u32 %s21, 2
        %s340 = sadd.s32 %s339, %s22
        %s341 = smul.u32 %s340, 8
        %v342 = vstv %s341
        %v343 = vadd.s32 %v338, %v342
        %vm344 = vcmp.lt.s32.totalorder %v343, 20
        %v345 = vsel %vm344, %v336, 0.0
        %v346 = vld [vmem:[%s259] sm:$0xff]
        %vm347 = vcmask 7168
        %v348 = vsel %vm347, %v345, 0.0
        %349 = vadd.xlane.f32.xlu0 %v348
        %v350 = vpop.xlane.xlu0 %349
        %v351 = vrot.slane %v350, 4
        %v352 = vadd.f32 %v350, %v351
        %v353 = vrot.slane %v352, 2
        %v354 = vadd.f32 %v352, %v353
        %v355 = vrot.slane %v354, 1
        %v356 = vadd.f32 %v354, %v355
        %s357 = vtos %v356
        %v358 = vstv %s357
        %v359 = vadd.f32 %v346, %v358
        %360 = vst [vmem:[%s259] sm:$0xff] %v359
        %s361 = sand.u32 %s139, 1
        %s362 = scalar_lea.sflag [#allocation3], %s361
        %s363 = sand.u32 %s139, 1
        %s364 = smul.addr %s363, 8
        %s365 = scalar_lea.vmem [#allocation2], %s364
        // Predicated region
        $region37: #{tpu_custom_call.1} parent=31 // pred_check
          %p366 = pneg %p149
        $region38: #{tpu_custom_call.1} parent=31 // pred_check_branch
          %368 = sbr.rel (%p366) target = $region40
        $region39: #{tpu_custom_call.1} parent=31 // pred_region
          %s370 = ssub.s32 128, 128
          %371 = vsyncadd %s362, %s370
          %s372 = smul.addr %s21, 128
          %s373 = scalar_lea.hbm %s3, %s372
          %s375 = sshll.u32 %s365, 4
          %s376 = int_to_ptr.vmem [resolvable:$true] %s375
          %378 = dma.vmem_to_hbm [thread:$0]  %s376, 128, %s373, %s362
        $region40: #{tpu_custom_call.1} parent=31 // pred_fallthru
          _
      $region32: #{tpu_custom_call.1} parent=5 // pred_fallthru
        _
      %p379 = scmp.le.s32.totalorder 2, %s12
      // Predicated region
      $region41: #{tpu_custom_call.1} parent=5 // pred_check
        %p380 = pneg %p379
      $region42: #{tpu_custom_call.1} parent=5 // pred_check_branch
        %382 = sbr.rel (%p380) target = $region44
      $region43: #{tpu_custom_call.1} parent=5 // pred_region
        %s383 = ssub.s32 %s12, 2
        // Predicated region
        $region45: #{tpu_custom_call.1} parent=43 // pred_check
          %p384 = pneg %p155
        $region46: #{tpu_custom_call.1} parent=43 // pred_check_branch
          %386 = sbr.rel (%p384) target = $region48
        $region47: #{tpu_custom_call.1} parent=43 // pred_region
          %s387 = sand.u32 %s140, 1
          %s388 = scalar_lea.sflag [#allocation3], %s387
          %s389 = sand.u32 %s140, 1
          %s390 = smul.addr %s389, 8
          %s391 = scalar_lea.vmem [#allocation2], %s390
          %392 = dma.done %s388, 128
        $region48: #{tpu_custom_call.1} parent=43 // pred_fallthru
          _
      $region44: #{tpu_custom_call.1} parent=5 // pred_fallthru
        _
    $region6: #{tpu_custom_call.1} parent=1 // loop_footer
      %s16 = sadd.s32 1, %s12
    $region7: #{tpu_custom_call.1} parent=1 // loop_footer_branch
      %11 = sbr.rel target = $region3
    $region8: #{tpu_custom_call.1} parent=1 // loop_exit
      _
    %393 = vsyncpa [#allocation3], 1
    %s394 = scalar_lea.sflag [#allocation3], 1
    %395 = vsyncpa %s394, 1

</llo_original>
